<compile_context>
chip_gen: v6e
topology: v6e:2x2x1
jax: 0.10.0
libtpu: 0.0.40
codegen_flags: <defaults>
</compile_context>

<pallas_src>
import functools

import jax
import jax.numpy as jnp
import numpy as np
from jax.experimental import pallas as pl
from jax.experimental.pallas import tpu as pltpu


def attention_kernel(x_ref, w1_ref, b1_ref, w2_ref, out_ref, wts_ref, *, valid_s):
    # x_ref block: (TB, S, H) — TB batch rows per grid step, S padded to %8==0.
    tb, s, hdim = x_ref.shape
    k = w1_ref.shape[1]

    x = x_ref[...]                                       # (TB, S, H) f32
    # Free sublane collapse (S % 8 == 0 guaranteed by the wrapper): no relayout.
    x2 = x.reshape(tb * s, hdim)                         # (TB*S, H)

    # Linear(H, 64) + ReLU: one (TB*S, H) @ (H, 64) MXU matmul, f32 accumulate.
    # TODO(synk): pass bf16 operands here if tolerance ever allows (v5e MXU).
    h = jnp.dot(x2, w1_ref[...], preferred_element_type=jnp.float32) + b1_ref[...]
    h = jnp.maximum(h, 0.0)                              # (TB*S, 64)

    # Linear(64, 1): degenerate N=1 matmul -> VPU multiply + XLU lane reduce
    # (keeps the MXU free).  b2 intentionally omitted: softmax over S is
    # shift-invariant, so a constant energy offset changes nothing downstream.
    h3 = h.reshape(tb, s, k)                             # (TB, S, 64), free view
    e = jnp.sum(h3 * w2_ref[...].reshape(1, 1, k), axis=-1)  # (TB, S), seq on lanes

    if valid_s != s:
        # Static branch: only emitted when the wrapper padded the sequence axis.
        seq_idx = jax.lax.broadcasted_iota(jnp.int32, (tb, s), 1)
        e = jnp.where(seq_idx < valid_s, e, -jnp.inf)

    # softmax over the sequence axis (dense (TB, S) tiles, lane reductions + EUP exp).
    m = jnp.max(e, axis=-1, keepdims=True)               # (TB, 1)
    p = jnp.exp(e - m)                                   # (TB, S)
    w = p / jnp.sum(p, axis=-1, keepdims=True)           # (TB, S)

    # Weighted pooling over the sequence: VPU multiply + sublane reduce.
    # (H/S < 128 means masked stores here, but output bytes are ~1/S and ~1/H of
    #  the input traffic, so transposed lane-dense output slabs are not worth the
    #  extra wrapper copies.)
    out_ref[...] = jnp.sum(x * w[:, :, None], axis=1).astype(out_ref.dtype)  # (TB, H)
    wts_ref[...] = w.astype(wts_ref.dtype)                                   # (TB, S)


def _vmem_limit_bytes():
    """Scoped VMEM limit: 3/4 of physical, capped at 96 MiB (v5e/v6e 128 MiB,
    v7x 64 MiB physical).  Falls back to the smallest (v7x) if the query fails."""
    try:
        phys = pltpu.get_tpu_info().vmem_capacity_bytes
    except Exception:
        phys = 64 << 20
    return int(min(96 << 20, (phys * 3) // 4))


def _auto_block_b(B, S, H, K, vmem_limit):
    """Batch-tile rows per grid step, sized from a VMEM byte budget."""
    itemsize = 4
    # Live VMEM per batch row inside one grid step:
    #   double-buffered x block + slack for one relayout copy      -> 3*S*H
    #   (S, 64) f32 ReLU intermediate (+ reshape/temporaries)      -> 2*S*K
    #   softmax temporaries e/p/w                                  -> ~6*S
    #   double-buffered out / weights blocks                       -> 2*H + 2*S
    row_bytes = itemsize * (3 * S * H + 2 * S * K + 8 * S + 2 * H)
    budget = max(4 << 20, vmem_limit // 2)   # leave half the limit for compiler scratch
    tb_vmem = max(8, (budget // row_bytes) // 8 * 8)
    # Keep the grid at >= ~4 steps when possible: pipeline overlap everywhere and
    # megacore sharding of the (parallel) batch axis on v7x's 2 TensorCores.
    tb_split = max(8, ((-(-B // 4)) + 7) // 8 * 8)
    tb = min(tb_vmem, tb_split)
    return B if tb >= B else tb


def attention_forward(x, w1, b1, w2, b2=None, *, block_b=None):
    """x: (B, S, H) float32. Returns (outputs (B, H), weights (B, S)).

    b2 is accepted for interface parity with the PyTorch module but is a
    mathematical no-op (softmax shift-invariance), so it is not sent to the kernel.
    """
    B, S, H = x.shape
    K = w1.shape[1]

    # Pad the sequence axis (only if needed) to a multiple of 8 so the in-kernel
    # sublane collapse is free; padded positions are masked out of the softmax.
    Sp = -(-S // 8) * 8
    x_in = x if Sp == S else jnp.pad(x, ((0, 0), (0, Sp - S), (0, 0)))

    vmem_limit = _vmem_limit_bytes()
    if block_b is None:
        block_b = _auto_block_b(B, Sp, H, K, vmem_limit)
    block_b = min(block_b, B)
    if block_b != B:
        block_b = max(8, (block_b // 8) * 8)   # non-full sublane blocks must be %8==0

    # Ragged final block handled by Pallas (OOB output rows are discarded);
    # no full-tensor jnp.pad of x along the batch axis.
    n_blocks = -(-B // block_b)

    b1_row = jnp.reshape(b1, (1, K))          # (64,)  -> (1, 64)
    w2_row = jnp.reshape(w2, (1, K))          # (64,1) -> (1, 64) VPU multiplier row

    kernel = functools.partial(attention_kernel, valid_s=S)

    flops = 2 * B * Sp * H * K + 2 * B * Sp * K + 2 * B * Sp * H
    bytes_accessed = 4 * (B * Sp * H + B * H + B * Sp + H * K + 2 * K)

    out, wts = pl.pallas_call(
        kernel,
        out_shape=(
            jax.ShapeDtypeStruct((B, H), jnp.float32),    # pooled outputs
            jax.ShapeDtypeStruct((B, Sp), jnp.float32),   # attention weights
        ),
        grid=(n_blocks,),
        in_specs=[
            pl.BlockSpec((block_b, Sp, H), lambda i: (i, 0, 0)),   # x: TB rows per step
            pl.BlockSpec((H, K), lambda i: (0, 0)),                # w1 (resident)
            pl.BlockSpec((1, K), lambda i: (0, 0)),                # b1
            pl.BlockSpec((1, K), lambda i: (0, 0)),                # w2 as a row vector
        ],
        out_specs=(
            pl.BlockSpec((block_b, H), lambda i: (i, 0)),
            pl.BlockSpec((block_b, Sp), lambda i: (i, 0)),
        ),
        compiler_params=pltpu.CompilerParams(
            dimension_semantics=("parallel",),     # batch axis shards across TCs on v7x
            vmem_limit_bytes=vmem_limit,
        ),
        cost_estimate=pl.CostEstimate(
            flops=flops,
            transcendentals=B * Sp,
            bytes_accessed=bytes_accessed,
        ),
    )(x_in, w1, b1_row, w2_row)

    if Sp != S:
        wts = wts[:, :S]
    return out, wts


def attention_reference(x, w1, b1, w2, b2):
    h = jnp.maximum(x @ w1 + b1, 0.0)           # (B, S, 64)
    e = (h @ w2 + b2)[..., 0]                   # (B, S)
    w = jax.nn.softmax(e, axis=1)               # (B, S)
    out = jnp.sum(x * w[..., None], axis=1)     # (B, H)
    return out, w


if __name__ == "__main__":
    B, S, H = 2, 8, 32

    key = jax.random.PRNGKey(0)
    kx, k1, k2, k3, k4 = jax.random.split(key, 5)

    # Deterministic synthetic parameters (shapes from nn.Linear(H,64), nn.Linear(64,1)).
    x = jax.random.normal(kx, (B, S, H), dtype=jnp.float32)
    w1 = jax.random.normal(k1, (H, 64), dtype=jnp.float32) * (1.0 / np.sqrt(H))
    b1 = jax.random.normal(k2, (64,), dtype=jnp.float32) * 0.1
    w2 = jax.random.normal(k3, (64, 1), dtype=jnp.float32) * (1.0 / np.sqrt(64))
    b2 = jax.random.normal(k4, (1,), dtype=jnp.float32) * 0.1

    outputs, weights = attention_forward(x, w1, b1, w2, b2)
    jax.block_until_ready((outputs, weights))

    ref_out, ref_w = attention_reference(x, w1, b1, w2, b2)
    np.testing.assert_allclose(np.asarray(outputs), np.asarray(ref_out), rtol=1e-5, atol=1e-5)
    np.testing.assert_allclose(np.asarray(weights), np.asarray(ref_w), rtol=1e-5, atol=1e-5)

    # Larger, non-divisible batch: exercises the multi-step grid and the ragged
    # (un-padded) final block path.
    B2 = 20
    x_big = jax.random.normal(jax.random.PRNGKey(1), (B2, S, H), dtype=jnp.float32)
    out2, wts2 = attention_forward(x_big, w1, b1, w2, b2, block_b=8)
    jax.block_until_ready((out2, wts2))
    ref_out2, ref_w2 = attention_reference(x_big, w1, b1, w2, b2)
    np.testing.assert_allclose(np.asarray(out2), np.asarray(ref_out2), rtol=1e-5, atol=1e-5)
    np.testing.assert_allclose(np.asarray(wts2), np.asarray(ref_w2), rtol=1e-5, atol=1e-5)

    # Auto-sized block path on the larger batch (no explicit block_b).
    out3, wts3 = attention_forward(x_big, w1, b1, w2, b2)
    jax.block_until_ready((out3, wts3))
    np.testing.assert_allclose(np.asarray(out3), np.asarray(ref_out2), rtol=1e-5, atol=1e-5)
    np.testing.assert_allclose(np.asarray(wts3), np.asarray(ref_w2), rtol=1e-5, atol=1e-5)

    print("KERNEL_OK")
</pallas_src>

<mosaic_0001>
module attributes {stable_mosaic.version = 11 : i64} {
  func.func @attention_kernel(%arg0: i32, %arg1: memref<2x8x32xf32, #tpu.memory_space<vmem>>, %arg2: memref<32x64xf32, #tpu.memory_space<vmem>>, %arg3: memref<1x64xf32, #tpu.memory_space<vmem>>, %arg4: memref<1x64xf32, #tpu.memory_space<vmem>>, %arg5: memref<2x32xf32, #tpu.memory_space<vmem>>, %arg6: memref<2x8xf32, #tpu.memory_space<vmem>>) attributes {dimension_semantics = [#tpu.dimension_semantics<parallel>], iteration_bounds = array<i64: 1>, scalar_prefetch = 0 : i64, scratch_operands = 0 : i64, tpu.core_type = #tpu.core_type<tc>, window_params = [{transform_indices = @transform_0, window_bounds = array<i64: 2, 8, 32>}, {pipeline_mode = #tpu.pipeline_mode<synchronous>, transform_indices = @transform_1, window_bounds = array<i64: 32, 64>}, {pipeline_mode = #tpu.pipeline_mode<synchronous>, transform_indices = @transform_2, window_bounds = array<i64: 1, 64>}, {pipeline_mode = #tpu.pipeline_mode<synchronous>, transform_indices = @transform_3, window_bounds = array<i64: 1, 64>}, {transform_indices = @transform_4, window_bounds = array<i64: 2, 32>}, {transform_indices = @transform_5, window_bounds = array<i64: 2, 8>}]} {
    %c0 = arith.constant 0 : index
    %c0_0 = arith.constant 0 : index
    %c0_1 = arith.constant 0 : index
    %0 = vector.load %arg1[%c0, %c0_0, %c0_1] : memref<2x8x32xf32, #tpu.memory_space<vmem>>, vector<2x8x32xf32>
    %1 = vector.shape_cast %0 : vector<2x8x32xf32> to vector<16x32xf32>
    %c0_2 = arith.constant 0 : index
    %c0_3 = arith.constant 0 : index
    %2 = vector.load %arg2[%c0_2, %c0_3] : memref<32x64xf32, #tpu.memory_space<vmem>>, vector<32x64xf32>
    %cst = arith.constant dense<0.000000e+00> : vector<16x64xf32>
    %3 = tpu.matmul %1, %2, %cst {dimension_numbers = #tpu.dot_dimension_numbers<[1], [0], [0], [1], [0, 0, 1, 1], [], []>} : vector<16x32xf32>, vector<32x64xf32>, vector<16x64xf32> -> vector<16x64xf32>
    %c0_4 = arith.constant 0 : index
    %c0_5 = arith.constant 0 : index
    %4 = vector.load %arg3[%c0_4, %c0_5] : memref<1x64xf32, #tpu.memory_space<vmem>>, vector<1x64xf32>
    %5 = vector.broadcast %4 : vector<1x64xf32> to vector<16x64xf32>
    %6 = arith.addf %3, %5 : vector<16x64xf32>
    %cst_6 = arith.constant 0.000000e+00 : f32
    %7 = vector.broadcast %cst_6 : f32 to vector<16x64xf32>
    %8 = arith.maximumf %6, %7 : vector<16x64xf32>
    %9 = vector.shape_cast %8 : vector<16x64xf32> to vector<2x8x64xf32>
    %c0_7 = arith.constant 0 : index
    %c0_8 = arith.constant 0 : index
    %10 = vector.load %arg4[%c0_7, %c0_8] : memref<1x64xf32, #tpu.memory_space<vmem>>, vector<1x64xf32>
    %11 = vector.shape_cast %10 : vector<1x64xf32> to vector<1x1x64xf32>
    %12 = vector.broadcast %11 : vector<1x1x64xf32> to vector<2x8x64xf32>
    %13 = arith.mulf %9, %12 : vector<2x8x64xf32>
    %cst_9 = arith.constant dense<0.000000e+00> : vector<2x8xf32>
    %14 = vector.multi_reduction <add>, %13, %cst_9 [2] : vector<2x8x64xf32> to vector<2x8xf32>
    %cst_10 = arith.constant dense<0xFF800000> : vector<2xf32>
    %15 = vector.multi_reduction <maximumf>, %14, %cst_10 [1] : vector<2x8xf32> to vector<2xf32>
    %16 = vector.shape_cast %15 : vector<2xf32> to vector<2x1xf32>
    %17 = vector.broadcast %16 : vector<2x1xf32> to vector<2x8xf32>
    %18 = arith.subf %14, %17 : vector<2x8xf32>
    %19 = math.exp %18 : vector<2x8xf32>
    %cst_11 = arith.constant dense<0.000000e+00> : vector<2xf32>
    %20 = vector.multi_reduction <add>, %19, %cst_11 [1] : vector<2x8xf32> to vector<2xf32>
    %21 = vector.shape_cast %20 : vector<2xf32> to vector<2x1xf32>
    %22 = vector.broadcast %21 : vector<2x1xf32> to vector<2x8xf32>
    %23 = arith.divf %19, %22 : vector<2x8xf32>
    %24 = vector.shape_cast %23 : vector<2x8xf32> to vector<2x8x1xf32>
    %25 = vector.broadcast %24 : vector<2x8x1xf32> to vector<2x8x32xf32>
    %26 = arith.mulf %0, %25 : vector<2x8x32xf32>
    %cst_12 = arith.constant dense<0.000000e+00> : vector<2x32xf32>
    %27 = vector.multi_reduction <add>, %26, %cst_12 [1] : vector<2x8x32xf32> to vector<2x32xf32>
    %c0_13 = arith.constant 0 : index
    %c0_14 = arith.constant 0 : index
    %28 = vector.load %arg5[%c0_13, %c0_14] : memref<2x32xf32, #tpu.memory_space<vmem>>, vector<2x32xf32>
    tpu.vector_store %arg5[%c0_13, %c0_14], %27 {strides = array<i32>} : memref<2x32xf32, #tpu.memory_space<vmem>>, vector<2x32xf32>,
    %c0_15 = arith.constant 0 : index
    %c0_16 = arith.constant 0 : index
    %29 = vector.load %arg6[%c0_15, %c0_16] : memref<2x8xf32, #tpu.memory_space<vmem>>, vector<2x8xf32>
    tpu.vector_store %arg6[%c0_15, %c0_16], %23 {strides = array<i32>} : memref<2x8xf32, #tpu.memory_space<vmem>>, vector<2x8xf32>,
    return
  }
  func.func @transform_0(%arg0: i32) -> (i32, i32, i32) {
    %c0_i32 = arith.constant 0 : i32
    %c0_i32_0 = arith.constant 0 : i32
    %c0_i32_1 = arith.constant 0 : i32
    return %arg0, %c0_i32, %c0_i32_0 : i32, i32, i32
  }
  func.func @transform_1(%arg0: i32) -> (i32, i32) {
    %c0_i32 = arith.constant 0 : i32
    %c0_i32_0 = arith.constant 0 : i32
    %c0_i32_1 = arith.constant 0 : i32
    return %c0_i32, %c0_i32_0 : i32, i32
  }
  func.func @transform_2(%arg0: i32) -> (i32, i32) {
    %c0_i32 = arith.constant 0 : i32
    %c0_i32_0 = arith.constant 0 : i32
    %c0_i32_1 = arith.constant 0 : i32
    return %c0_i32, %c0_i32_0 : i32, i32
  }
  func.func @transform_3(%arg0: i32) -> (i32, i32) {
    %c0_i32 = arith.constant 0 : i32
    %c0_i32_0 = arith.constant 0 : i32
    %c0_i32_1 = arith.constant 0 : i32
    return %c0_i32, %c0_i32_0 : i32, i32
  }
  func.func @transform_4(%arg0: i32) -> (i32, i32) {
    %c0_i32 = arith.constant 0 : i32
    %c0_i32_0 = arith.constant 0 : i32
    return %arg0, %c0_i32 : i32, i32
  }
  func.func @transform_5(%arg0: i32) -> (i32, i32) {
    %c0_i32 = arith.constant 0 : i32
    %c0_i32_0 = arith.constant 0 : i32
    return %arg0, %c0_i32 : i32, i32
  }
}

</mosaic_0001>

<llo_original>
// kernel: tpu_custom_call.1
$region0: #{tpu_custom_call.1}
  #allocation0 [shape = 'u32[]', space=smem, size = 0x4, offset = 0x4, fixed_abs, tag = 'smem constant byte address 0x4 - core index']
  #allocation1 [shape = 'u32[144,128]{1,0:T(1,128)}', space=vmem, size = 0x12000, scoped, tag = 'internal scratch']
  %s0 = inlined_call_operand.hbm [shape: f32[2,8,32], index: 0, kind: input, shape index: {}]
  %s1 = inlined_call_operand.hbm [shape: f32[32,64], index: 1, kind: input, shape index: {}]
  %s2 = inlined_call_operand.vmem [shape: f32[1,64], index: 2, kind: input, shape index: {}]
  %s3 = inlined_call_operand.vmem [shape: f32[1,64], index: 3, kind: input, shape index: {}]
  %s4 = inlined_call_operand.hbm [shape: f32[2,32], index: 4, kind: output, shape index: {0}]
  %s5 = inlined_call_operand.hbm [shape: f32[2,8], index: 5, kind: output, shape index: {1}]
  %6 = xla_tuple %s4, %s5
  %s7 = sld [smem:[#allocation0]]
  $region42: #{tpu_custom_call.1} parent=0
    _
  %s9 = ssub.s32 1, %s7
  %s10 = scalar_select 0, %s9, %s7
  $region1: #{tpu_custom_call.1} parent=0
    #allocation2 [shape = 'u8[8192]{0}', space=vmem, size = 0x2000, scoped, tag = 'input window, operand 0, single buffered']
    #allocation3 [shape = 's32[1]{0}', space=sflag, size = 0x4, scoped, tag = 'scoped memory for tpu_custom_call.1']
    #allocation4 [shape = 's32[1]{0}', space=sflag, size = 0x4, scoped, tag = 'scoped memory for tpu_custom_call.1']
    #allocation5 [shape = 'u8[16384]{0}', space=vmem, size = 0x4000, scoped, tag = 'input window, operand 1, single buffered']
    #allocation6 [shape = 's32[1]{0}', space=sflag, size = 0x4, scoped, tag = 'scoped memory for tpu_custom_call.1']
    #allocation7 [shape = 'u8[1024]{0}', space=vmem, size = 0x400, scoped, tag = 'output window, operand 0, single buffered']
    #allocation8 [shape = 'u8[1024]{0}', space=vmem, size = 0x400, scoped, tag = 'output window, operand 1, single buffered']
    #allocation9 [shape = 's32[1]{0}', space=sflag, size = 0x4, scoped, tag = 'scoped memory for tpu_custom_call.1']
    %11 = vsyncpa [#allocation3], 0
    %12 = vsyncpa [#allocation6], 0
    %13 = vsyncpa [#allocation4], 0
    %14 = vsyncpa [#allocation9], 0
    // Predicated region
    $region2: #{tpu_custom_call.1} parent=1 // pred_check
      _
    $region3: #{tpu_custom_call.1} parent=1 // pred_check_branch
      %16 = sbr.rel (0) target = $region5
    $region4: #{tpu_custom_call.1} parent=1 // pred_region
      %s18 = ssub.s32 256, 256
      %19 = vsyncadd [#allocation3], %s18
      %s20 = sshll.u32 [#allocation2], 4
      %s21 = int_to_ptr.vmem [resolvable:$true] %s20
      %26 = dma.hbm_to_vmem [thread:$0]  %s0, 256, %s21, [#allocation3], 128, 128, 8
    $region5: #{tpu_custom_call.1} parent=1 // pred_fallthru
      _
    // Predicated region
    $region6: #{tpu_custom_call.1} parent=1 // pred_check
      _
    $region7: #{tpu_custom_call.1} parent=1 // pred_check_branch
      %28 = sbr.rel (0) target = $region9
    $region8: #{tpu_custom_call.1} parent=1 // pred_region
      %s30 = ssub.s32 512, 512
      %31 = vsyncadd [#allocation6], %s30
      %s32 = sshll.u32 [#allocation5], 4
      %s33 = int_to_ptr.vmem [resolvable:$true] %s32
      %38 = dma.hbm_to_vmem [thread:$0]  %s1, 512, %s33, [#allocation6], 128, 128, 8
    $region9: #{tpu_custom_call.1} parent=1 // pred_fallthru
      _
    // Predicated region
    $region10: #{tpu_custom_call.1} parent=1 // pred_check
      _
    $region11: #{tpu_custom_call.1} parent=1 // pred_check_branch
      %40 = sbr.rel (0) target = $region13
    $region12: #{tpu_custom_call.1} parent=1 // pred_region
      _
    $region13: #{tpu_custom_call.1} parent=1 // pred_fallthru
      _
    // Predicated region
    $region14: #{tpu_custom_call.1} parent=1 // pred_check
      _
    $region15: #{tpu_custom_call.1} parent=1 // pred_check_branch
      %42 = sbr.rel (0) target = $region17
    $region16: #{tpu_custom_call.1} parent=1 // pred_region
      _
    $region17: #{tpu_custom_call.1} parent=1 // pred_fallthru
      _
    // Predicated region
    $region18: #{tpu_custom_call.1} parent=1 // pred_check
      _
    $region19: #{tpu_custom_call.1} parent=1 // pred_check_branch
      %44 = sbr.rel (0) target = $region21
    $region20: #{tpu_custom_call.1} parent=1 // pred_region
      %45 = dma.done [#allocation3], 256
    $region21: #{tpu_custom_call.1} parent=1 // pred_fallthru
      _
    // Predicated region
    $region22: #{tpu_custom_call.1} parent=1 // pred_check
      _
    $region23: #{tpu_custom_call.1} parent=1 // pred_check_branch
      %47 = sbr.rel (0) target = $region25
    $region24: #{tpu_custom_call.1} parent=1 // pred_region
      %48 = dma.done [#allocation6], 512
    $region25: #{tpu_custom_call.1} parent=1 // pred_fallthru
      _
    %v49 = vld [vmem:[#allocation2] sm:$0xff]
    %v50 = vld [vmem:[#allocation2 + $0x8] sm:$0xff]
    %v51 = vld [vmem:[#allocation5] sm:$0xff]
    %v52 = vld [vmem:[#allocation5 + $0x8] sm:$0xff]
    %v53 = vld [vmem:[#allocation5 + $0x10] sm:$0xff]
    %v54 = vld [vmem:[#allocation5 + $0x18] sm:$0xff]
    %v55 = vld [vmem:[%s2] sm:$0x1]
    %v57 = vlaneseq
    %v58 = vshrl.u32 %v57, 7
    %v59 = vsub.s32 0, %v58
    %v60 = vrot.slane %v55, %v59
    %vm62 = vcmask 261120
    %v64 = vsel %vm62, %v49, 0
    %v67 = vsel %vm62, %v50, 0
    %69 = vmatprep.subr.mxu0 0.0
    %70 = vmatpush1.msra.mxu0 0.0
    %71 = vmatprep.subr.mxu0 0.0
    %72 = vmatpush1.msra.mxu0 0.0
    %73 = vmatprep.subr.mxu0 0.0
    %74 = vmatpush1.msra.mxu0 0.0
    %75 = vmatprep.subr.mxu0 0.0
    %76 = vmatpush1.msra.mxu0 0.0
    %77 = vmatprep.subr.mxu0 0.0
    %78 = vmatpush1.msra.mxu0 0.0
    %79 = vmatprep.subr.mxu0 0.0
    %80 = vmatpush1.msra.mxu0 0.0
    %81 = vmatprep.subr.mxu0 0.0
    %82 = vmatpush1.msra.mxu0 0.0
    %83 = vmatprep.subr.mxu0 0.0
    %84 = vmatpush1.msra.mxu0 0.0
    %85 = vmatprep.subr.mxu0 0.0
    %86 = vmatpush1.msra.mxu0 0.0
    %87 = vmatprep.subr.mxu0 0.0
    %88 = vmatpush1.msra.mxu0 0.0
    %89 = vmatprep.subr.mxu0 0.0
    %90 = vmatpush1.msra.mxu0 0.0
    %91 = vmatprep.subr.mxu0 0.0
    %92 = vmatpush1.msra.mxu0 0.0
    %93 = vmatprep.subr.mxu0 0.0
    %94 = vmatpush1.msra.mxu0 %v54
    %95 = vmatprep.subr.mxu0 0.0
    %96 = vmatpush1.msra.mxu0 %v53
    %97 = vmatprep.subr.mxu0 0.0
    %98 = vmatpush1.msra.mxu0 %v52
    %99 = vmatprep.subr.mxu0 0.0
    %100 = vmatpush1.msra.mxu0 %v51
    %101 = vmatprep.subr.mxu0 0.0
    %102 = vmatpush2.msra.mxu0 0.0
    %103 = vmatprep.subr.mxu0 0.0
    %104 = vmatpush2.msra.mxu0 0.0
    %105 = vmatprep.subr.mxu0 0.0
    %106 = vmatpush2.msra.mxu0 0.0
    %107 = vmatprep.subr.mxu0 0.0
    %108 = vmatpush2.msra.mxu0 0.0
    %109 = vmatprep.subr.mxu0 0.0
    %110 = vmatpush2.msra.mxu0 0.0
    %111 = vmatprep.subr.mxu0 0.0
    %112 = vmatpush2.msra.mxu0 0.0
    %113 = vmatprep.subr.mxu0 0.0
    %114 = vmatpush2.msra.mxu0 0.0
    %115 = vmatprep.subr.mxu0 0.0
    %116 = vmatpush2.msra.mxu0 0.0
    %117 = vmatprep.subr.mxu0 0.0
    %118 = vmatpush2.msra.mxu0 0.0
    %119 = vmatprep.subr.mxu0 0.0
    %120 = vmatpush2.msra.mxu0 0.0
    %121 = vmatprep.subr.mxu0 0.0
    %122 = vmatpush2.msra.mxu0 0.0
    %123 = vmatprep.subr.mxu0 0.0
    %124 = vmatpush2.msra.mxu0 0.0
    %125 = vmatprep.subr.mxu0 0.0
    %126 = vmatpush2.msra.mxu0 0.0
    %127 = vmatprep.subr.mxu0 0.0
    %128 = vmatpush2.msra.mxu0 0.0
    %129 = vmatprep.subr.mxu0 0.0
    %130 = vmatpush2.msra.mxu0 0.0
    %131 = vmatprep.subr.mxu0 0.0
    %132 = vmatpush2.msra.mxu0 0.0
    %133 = vmatprep.mubr.f32.mxu0 0.0
    %134 = vmatmul.mubr.f32.gmra.mxu0 %v64
    %v135 = vpop.f32.mrf.mxu0
    %v136 = vadd.f32 %v60, %v135
    %v137 = vpop.f32.mrf.mxu0
    %138 = vmatprep.mubr.f32.mxu0 0.0
    %139 = vmatmul.mubr.f32.gmra.mxu0 %v67
    %v140 = vpop.f32.mrf.mxu0
    %v141 = vadd.f32 %v60, %v140
    %v142 = vpop.f32.mrf.mxu0
    %143 = vdwg.mxu0
    %v144 = vmax.f32 %v136, 0.0
    %v145 = vmax.f32 %v141, 0.0
    %v146 = vld [vmem:[%s3] sm:$0x1]
    %v148 = vlaneseq
    %v149 = vshrl.u32 %v148, 7
    %v150 = vsub.s32 0, %v149
    %v151 = vrot.slane %v146, %v150
    %v153 = vmul.f32 %v144, %v151
    %v154 = vmul.f32 %v145, %v151
    %vm155 = vcmask 523264
    %v156 = vsel %vm155, %v153, 0.0
    %157 = vadd.xlane.f32.xlu0 %v156
    %v158 = vpop.xlane.xlu0 %157
    %v159 = vsel %vm155, %v154, 0.0
    %160 = vadd.xlane.f32.xlu0 %v159
    %v161 = vpop.xlane.xlu0 %160
    %v164 = vlaneseq
    %v165 = vand.u32 %v164, 127
    %v166 = vlaneseq
    %v167 = vshrl.u32 %v166, 7
    %v168 = vsub.s32 %v165, %v167
    %v169 = vrot.slane %v158, %v168
    %v170 = vlaneseq
    %v171 = vshrl.u32 %v170, 7
    %v172 = vsub.s32 %v165, %v171
    %v173 = vrot.slane %v161, %v172
    %vm174 = vcmask 1041409
    %v175 = vsel %vm174, %v173, %v169
    %vm177 = vcmask 58368
    %v178 = vsel %vm177, %v175, -inf
    %179 = vmax.xlane.f32.xlu0 %v178
    %v180 = vpop.xlane.xlu0 %179
    %v182 = vlaneseq
    %v183 = vshrl.u32 %v182, 7
    %v184 = vsub.s32 0, %v183
    %v185 = vrot.slane %v180, %v184
    %v186 = vlaneseq
    %v187 = vshrl.u32 %v186, 7
    %v188 = vsub.s32 1, %v187
    %v189 = vrot.slane %v180, %v188
    %v192 = vsub.f32 %v158, %v185
    %v193 = vsub.f32 %v161, %v189
    %v194 = vmul.f32 %v192, 1.442695
    %v195 = vpow.pop %v194
    %v196 = vmul.f32 %v193, 1.442695
    %v197 = vpow.pop %v196
    %200 = vset.pattern.permute.xlu0 0
    %201 = vperm.xlu0 %200, %v195
    %v202 = vpop.permute.xlu0 %201
    %203 = vset.pattern.permute.xlu0 0
    %204 = vperm.xlu0 %203, %v197
    %v205 = vpop.permute.xlu0 %204
    %v206 = vlaneseq
    %v207 = vshrl.u32 %v206, 7
    %v208 = vsub.s32 %v165, %v207
    %v209 = vrot.slane %v202, %v208
    %v210 = vlaneseq
    %v211 = vshrl.u32 %v210, 7
    %v212 = vsub.s32 %v165, %v211
    %v213 = vrot.slane %v205, %v212
    %v214 = vsel %vm174, %v213, %v209
    %v216 = vsel %vm177, %v214, 0.0
    %217 = vadd.xlane.f32.xlu0 %v216
    %v218 = vpop.xlane.xlu0 %217
    %v220 = vlaneseq
    %v221 = vshrl.u32 %v220, 7
    %v222 = vsub.s32 0, %v221
    %v223 = vrot.slane %v218, %v222
    %v224 = vlaneseq
    %v225 = vshrl.u32 %v224, 7
    %v226 = vsub.s32 1, %v225
    %v227 = vrot.slane %v218, %v226
    %v230 = vrcp.pop %v223
    %v231 = vmul.f32 %v195, %v230
    %v232 = vrcp.pop %v227
    %v233 = vmul.f32 %v197, %v232
    %235 = vset.pattern.permute.xlu0 0
    %236 = vperm.xlu0 %235, %v231
    %v237 = vpop.permute.xlu0 %236
    %240 = vset.pattern.permute.xlu0 0
    %241 = vperm.xlu0 %240, %v233
    %v242 = vpop.permute.xlu0 %241
    %v244 = vmul.f32 %v49, %v237
    %v245 = vmul.f32 %v50, %v242
    %v246 = vsel %vm62, %v244, 0.0
    %v247 = vrot.slane %v246, 4
    %v248 = vadd.f32 %v246, %v247
    %v249 = vrot.slane %v248, 2
    %v250 = vadd.f32 %v248, %v249
    %v251 = vrot.slane %v250, 1
    %v252 = vadd.f32 %v250, %v251
    %v253 = vsel %vm62, %v245, 0.0
    %v254 = vrot.slane %v253, 4
    %v255 = vadd.f32 %v253, %v254
    %v256 = vrot.slane %v255, 2
    %v257 = vadd.f32 %v255, %v256
    %v258 = vrot.slane %v257, 1
    %v259 = vadd.f32 %v257, %v258
    %v262 = vsel %vm174, %v259, %v252
    %vm264 = vcmask 254976
    %265 = vst.msk [vmem:[#allocation7] sm:$0x3] %vm264, %v262
    %v266 = vlaneseq
    %v267 = vshrl.u32 %v266, 7
    %v268 = vsub.s32 %v165, %v267
    %v269 = vrot.slane %v237, %v268
    %v270 = vlaneseq
    %v271 = vshrl.u32 %v270, 7
    %v272 = vsub.s32 %v165, %v271
    %v273 = vrot.slane %v242, %v272
    %v274 = vsel %vm174, %v273, %v269
    %276 = vst.msk [vmem:[#allocation8] sm:$0x3] %vm177, %v274
    // Predicated region
    $region26: #{tpu_custom_call.1} parent=1 // pred_check
      _
    $region27: #{tpu_custom_call.1} parent=1 // pred_check_branch
      %278 = sbr.rel (0) target = $region29
    $region28: #{tpu_custom_call.1} parent=1 // pred_region
      %s280 = ssub.s32 32, 32
      %281 = vsyncadd [#allocation4], %s280
      %s283 = sshll.u32 [#allocation7], 4
      %s284 = int_to_ptr.vmem [resolvable:$true] %s283
      %286 = dma.vmem_to_hbm [thread:$0]  %s284, 32, %s4, [#allocation4]
    $region29: #{tpu_custom_call.1} parent=1 // pred_fallthru
      _
    // Predicated region
    $region30: #{tpu_custom_call.1} parent=1 // pred_check
      _
    $region31: #{tpu_custom_call.1} parent=1 // pred_check_branch
      %288 = sbr.rel (0) target = $region33
    $region32: #{tpu_custom_call.1} parent=1 // pred_region
      %s290 = ssub.s32 32, 32
      %291 = vsyncadd [#allocation9], %s290
      %s293 = sshll.u32 [#allocation8], 4
      %s294 = int_to_ptr.vmem [resolvable:$true] %s293
      %296 = dma.vmem_to_hbm [thread:$0]  %s294, 32, %s5, [#allocation9]
    $region33: #{tpu_custom_call.1} parent=1 // pred_fallthru
      _
    // Predicated region
    $region34: #{tpu_custom_call.1} parent=1 // pred_check
      _
    $region35: #{tpu_custom_call.1} parent=1 // pred_check_branch
      %298 = sbr.rel (0) target = $region37
    $region36: #{tpu_custom_call.1} parent=1 // pred_region
      %299 = dma.done [#allocation4], 32
    $region37: #{tpu_custom_call.1} parent=1 // pred_fallthru
      _
    // Predicated region
    $region38: #{tpu_custom_call.1} parent=1 // pred_check
      _
    $region39: #{tpu_custom_call.1} parent=1 // pred_check_branch
      %301 = sbr.rel (0) target = $region41
    $region40: #{tpu_custom_call.1} parent=1 // pred_region
      %302 = dma.done [#allocation9], 32
    $region41: #{tpu_custom_call.1} parent=1 // pred_fallthru
      _
    %303 = vsyncpa [#allocation3], 1
    %304 = vsyncpa [#allocation6], 1
    %305 = vsyncpa [#allocation4], 1
    %306 = vsyncpa [#allocation9], 1

</llo_original>
